<compile_context>
chip_gen: v5e
topology: v5e:2x2
jax: 0.10.0
libtpu: 0.0.40
codegen_flags: <defaults>
</compile_context>

<pallas_src>
import math
import jax
import jax.numpy as jnp
from jax.experimental import pallas as pl
from jax.experimental.pallas import tpu as pltpu


def _round_up(v, m):
    return ((v + m - 1) // m) * m


# ----------------------------------------------------------------------------
# Kernel 1: user query projection (tiny; runs once per forward)
#   word_query = tanh( relu(e_u @ Wq + bq) @ Wp_pad + bp_pad ) * (1/sqrt(H))
#   Output is lane-padded to H_pad; padded lanes are exactly 0 (tanh(0)*s = 0).
# ----------------------------------------------------------------------------
def _make_query_kernel(scale):
    def _query_kernel(eu_ref, wq_ref, bq_ref, wp_ref, bp_ref, out_ref):
        h = jnp.dot(eu_ref[...], wq_ref[...],
                    preferred_element_type=jnp.float32) + bq_ref[...]
        h = jnp.maximum(h, 0.0)                                   # ReLU
        o = jnp.dot(h, wp_ref[...],
                    preferred_element_type=jnp.float32) + bp_ref[...]
        out_ref[...] = jnp.tanh(o) * scale                        # Tanh, 1/sqrt(H) folded
    return _query_kernel


def query_project(e_u, wq, bq, wp_pad, bp_pad, *, scale):
    B = e_u.shape[0]
    H_pad = wp_pad.shape[-1]
    return pl.pallas_call(
        _make_query_kernel(scale),
        out_shape=jax.ShapeDtypeStruct((B, H_pad), jnp.float32),
    )(e_u, wq, bq, wp_pad, bp_pad)


# ----------------------------------------------------------------------------
# Kernel 2: fused Conv1d(k=3, pad=1) + ReLU + personalized scaled-dp attention.
#   One grid step == TB news items.
#   x_ref   : (TB, L, K_pad)   im2col slab (3E packed + zero lanes), compute dtype
#   q_ref   : (1, 1, H_pad)    pre-scaled personalized word query (f32)
#   w_ref   : (K_pad, H_pad)   packed conv taps, compute dtype
#   b_ref   : (1, H_pad)       conv bias (f32)
#   emb_ref : (TB, L, H_pad)   per-token hidden vectors (f32)
#   rep_ref : (TB, H_pad)      news representation (f32)
# ----------------------------------------------------------------------------
def _conv_attn_kernel(x_ref, q_ref, w_ref, b_ref, emb_ref, rep_ref):
    TB, L, K = x_ref.shape
    H = w_ref.shape[-1]

    # fused 3-tap conv as a single MXU push: (TB*L, K_pad) @ (K_pad, H_pad)
    x2 = x_ref[...].reshape(TB * L, K)
    h = jnp.dot(x2, w_ref[...], preferred_element_type=jnp.float32)
    h = jnp.maximum(h + b_ref[...], 0.0)                          # ReLU, f32 accum
    h3 = h.reshape(TB, L, H)
    emb_ref[...] = h3.astype(emb_ref.dtype)

    # personalized scaled-dp attention (1/sqrt(H) already folded into q)
    q = q_ref[...].astype(jnp.float32)                            # (1, 1, H_pad)
    s = jnp.sum(h3 * q, axis=-1, keepdims=True)                   # (TB, L, 1) scores
    s = s - jnp.max(s, axis=1, keepdims=True)
    p = jnp.exp(s)
    p = p / jnp.sum(p, axis=1, keepdims=True)                     # softmax over L tokens
    rep_ref[...] = jnp.sum(p * h3, axis=1).astype(rep_ref.dtype)  # (TB, H_pad)


def conv_attention(x_im2col, q3, w_packed, b_pad, *, tb, nb, batch):
    BNp, L, K_pad = x_im2col.shape
    H_pad = w_packed.shape[-1]
    emb, rep = pl.pallas_call(
        _conv_attn_kernel,
        out_shape=(
            jax.ShapeDtypeStruct((BNp, L, H_pad), jnp.float32),
            jax.ShapeDtypeStruct((BNp, H_pad), jnp.float32),
        ),
        grid_spec=pltpu.PrefetchScalarGridSpec(
            num_scalar_prefetch=0,
            grid=(batch, nb),
            in_specs=[
                pl.BlockSpec((tb, L, K_pad), lambda b, j: (b * nb + j, 0, 0)),
                pl.BlockSpec((1, 1, H_pad), lambda b, j: (b, 0, 0)),   # q replicated via index_map
                pl.BlockSpec((K_pad, H_pad), lambda b, j: (0, 0)),
                pl.BlockSpec((1, H_pad), lambda b, j: (0, 0)),
            ],
            out_specs=[
                pl.BlockSpec((tb, L, H_pad), lambda b, j: (b * nb + j, 0, 0)),
                pl.BlockSpec((tb, H_pad), lambda b, j: (b * nb + j, 0)),
            ],
        ),
        compiler_params=pltpu.CompilerParams(
            dimension_semantics=("parallel", "parallel")),
    )(x_im2col, q3, w_packed, b_pad)
    return emb, rep


# ----------------------------------------------------------------------------
# Full forward (glue: embedding gathers / padding / im2col layout in plain JAX)
# ----------------------------------------------------------------------------
def npa_encoder_forward(news_batch, user_index, params, *,
                        tile_items=64, compute_dtype=jnp.bfloat16):
    B, N, L = news_batch.shape
    E = params["word_emb"].shape[-1]
    H = params["b_conv"].shape[-1]

    LANE = 128
    H_pad = _round_up(H, LANE)
    K = 3 * E
    K_pad = _round_up(K, LANE)
    # items per grid step: multiple of 8 (sublane), capped by tile_items.
    # Tiles here are tiny (<1 MiB) so they fit the v7x 64 MiB VMEM with room to spare.
    tb = _round_up(min(tile_items, _round_up(N, 8)), 8)
    n_pad = _round_up(N, tb)
    nb = n_pad // tb

    # ---- glue: embedding lookups (gather) ----
    x = params["word_emb"][news_batch]                            # (B, N, L, E)
    e_u = params["user_emb"][user_index]                          # (B, user_dim)

    # ---- Pallas kernel 1: personalized word query (scale folded, lane-padded) ----
    wp_pad = jnp.pad(params["wp"], ((0, 0), (0, H_pad - H)))
    bp_pad = jnp.pad(params["bp"], ((0, 0), (0, H_pad - H)))
    word_query = query_project(e_u, params["wq"], params["bq"], wp_pad, bp_pad,
                               scale=1.0 / math.sqrt(H))          # (B, H_pad)
    q3 = word_query[:, None, :]                                   # (B, 1, H_pad)

    # ---- layout plumbing: item pad, per-item L pad, im2col (K=3E), lane pad, cast ----
    x = jnp.pad(x, ((0, 0), (0, n_pad - N), (0, 0), (0, 0)))
    x = x.reshape(B * n_pad, L, E)
    xp = jnp.pad(x, ((0, 0), (1, 1), (0, 0)))                     # zero pad=1 along L (per item)
    x_im2col = jnp.concatenate([xp[:, 0:L], xp[:, 1:L + 1], xp[:, 2:L + 2]], axis=-1)
    x_im2col = jnp.pad(x_im2col, ((0, 0), (0, 0), (0, K_pad - K))).astype(compute_dtype)

    # conv taps stacked along K: rows [0:E]=tap x[l-1], [E:2E]=tap x[l], [2E:3E]=tap x[l+1]
    w_packed = params["w_conv"].reshape(K, H)
    w_packed = jnp.pad(w_packed, ((0, K_pad - K), (0, H_pad - H))).astype(compute_dtype)
    b_pad = jnp.pad(params["b_conv"], ((0, 0), (0, H_pad - H)))   # f32 bias

    # ---- Pallas kernel 2: fused conv + ReLU + personalized attention ----
    emb, rep = conv_attention(x_im2col, q3, w_packed, b_pad, tb=tb, nb=nb, batch=B)

    news_embedding = emb.reshape(B, n_pad, L, H_pad)[:, :N, :, :H].reshape(B, N, L, 1, H)
    news_repr = rep.reshape(B, n_pad, H_pad)[:, :N, :H]
    return news_embedding, news_repr


# ----------------------------------------------------------------------------
# Pure-JAX reference (for correctness check)
# ----------------------------------------------------------------------------
def npa_encoder_reference(news_batch, user_index, params):
    B, N, L = news_batch.shape
    E = params["word_emb"].shape[-1]
    H = params["b_conv"].shape[-1]

    e_u = params["user_emb"][user_index]
    q = jnp.tanh(jnp.maximum(e_u @ params["wq"] + params["bq"], 0.0)
                 @ params["wp"] + params["bp"])                   # [B, H]

    x = params["word_emb"][news_batch].reshape(B * N, L, E)
    xp = jnp.pad(x, ((0, 0), (1, 1), (0, 0)))
    h = (xp[:, :-2] @ params["w_conv"][0]
         + xp[:, 1:-1] @ params["w_conv"][1]
         + xp[:, 2:] @ params["w_conv"][2]
         + params["b_conv"])
    h = jnp.maximum(h, 0.0)                                       # [B*N, L, H]

    qn = jnp.repeat(q, N, axis=0)[:, None, :]                     # [B*N, 1, H]
    scores = jnp.einsum("bqh,blh->bql", qn, h) / math.sqrt(H)
    attn = jax.nn.softmax(scores, axis=-1)
    rep = jnp.einsum("bql,blh->bqh", attn, h)[:, 0, :]
    return h.reshape(B, N, L, 1, H), rep.reshape(B, N, H)


# ----------------------------------------------------------------------------
if __name__ == "__main__":
    # hparams (small, consistent with the module)
    B, N, L = 2, 2, 8            # batch, news per batch, signal_length
    embedding_dim = 32
    hidden_dim = 32              # filter_num
    user_dim = 16
    query_dim = 16
    vocab_size = 50
    user_num = 5

    key = jax.random.PRNGKey(0)
    ks = jax.random.split(key, 10)

    params = {
        "word_emb": 0.1 * jax.random.normal(ks[0], (vocab_size, embedding_dim), jnp.float32),
        "user_emb": 0.1 * jax.random.normal(ks[1], (user_num + 1, user_dim), jnp.float32),
        # Linear weights stored pre-transposed (in_dim, out_dim); biases as (1, out_dim)
        "wq": 0.1 * jax.random.normal(ks[2], (user_dim, query_dim), jnp.float32),
        "bq": 0.1 * jax.random.normal(ks[3], (1, query_dim), jnp.float32),
        "wp": 0.1 * jax.random.normal(ks[4], (query_dim, hidden_dim), jnp.float32),
        "bp": 0.1 * jax.random.normal(ks[5], (1, hidden_dim), jnp.float32),
        # conv taps: tap k = W_torch[:, :, k].T, stacked -> (3, E, H)
        "w_conv": 0.1 * jax.random.normal(ks[6], (3, embedding_dim, hidden_dim), jnp.float32),
        "b_conv": 0.1 * jax.random.normal(ks[7], (1, hidden_dim), jnp.float32),
    }

    news_batch = jax.random.randint(ks[8], (B, N, L), 0, vocab_size, dtype=jnp.int32)
    user_index = jax.random.randint(ks[9], (B,), 0, user_num + 1, dtype=jnp.int32)

    ref_emb, ref_rep = npa_encoder_reference(news_batch, user_index, params)

    # f32 compute path: tight tolerance
    emb_f32, rep_f32 = jax.block_until_ready(
        npa_encoder_forward(news_batch, user_index, params, compute_dtype=jnp.float32))
    assert emb_f32.shape == (B, N, L, 1, hidden_dim)
    assert rep_f32.shape == (B, N, hidden_dim)
    assert float(jnp.max(jnp.abs(emb_f32 - ref_emb))) < 5e-4
    assert float(jnp.max(jnp.abs(rep_f32 - ref_rep))) < 5e-4

    # bf16 MXU path (default / optimized): looser tolerance
    emb_bf16, rep_bf16 = jax.block_until_ready(
        npa_encoder_forward(news_batch, user_index, params, compute_dtype=jnp.bfloat16))
    assert emb_bf16.shape == (B, N, L, 1, hidden_dim)
    assert rep_bf16.shape == (B, N, hidden_dim)
    assert float(jnp.max(jnp.abs(emb_bf16 - ref_emb))) < 3e-2
    assert float(jnp.max(jnp.abs(rep_bf16 - ref_rep))) < 3e-2

    print("KERNEL_OK")
</pallas_src>

<mosaic_0001>
module attributes {stable_mosaic.version = 11 : i64} {
  func.func @_query_kernel(%arg0: memref<2x16xf32, #tpu.memory_space<vmem>>, %arg1: memref<16x16xf32, #tpu.memory_space<vmem>>, %arg2: memref<1x16xf32, #tpu.memory_space<vmem>>, %arg3: memref<16x128xf32, #tpu.memory_space<vmem>>, %arg4: memref<1x128xf32, #tpu.memory_space<vmem>>, %arg5: memref<2x128xf32, #tpu.memory_space<vmem>>) attributes {dimension_semantics = [], scalar_prefetch = 0 : i64, scratch_operands = 0 : i64, tpu.core_type = #tpu.core_type<tc>} {
    %c0 = arith.constant 0 : index
    %c0_0 = arith.constant 0 : index
    %0 = vector.load %arg0[%c0, %c0_0] : memref<2x16xf32, #tpu.memory_space<vmem>>, vector<2x16xf32>
    %c0_1 = arith.constant 0 : index
    %c0_2 = arith.constant 0 : index
    %1 = vector.load %arg1[%c0_1, %c0_2] : memref<16x16xf32, #tpu.memory_space<vmem>>, vector<16x16xf32>
    %cst = arith.constant dense<0.000000e+00> : vector<2x16xf32>
    %2 = tpu.matmul %0, %1, %cst {dimension_numbers = #tpu.dot_dimension_numbers<[1], [0], [0], [1], [0, 0, 1, 1], [], []>} : vector<2x16xf32>, vector<16x16xf32>, vector<2x16xf32> -> vector<2x16xf32>
    %c0_3 = arith.constant 0 : index
    %c0_4 = arith.constant 0 : index
    %3 = vector.load %arg2[%c0_3, %c0_4] : memref<1x16xf32, #tpu.memory_space<vmem>>, vector<1x16xf32>
    %4 = vector.broadcast %3 : vector<1x16xf32> to vector<2x16xf32>
    %5 = arith.addf %2, %4 : vector<2x16xf32>
    %cst_5 = arith.constant 0.000000e+00 : f32
    %6 = vector.broadcast %cst_5 : f32 to vector<2x16xf32>
    %7 = arith.maximumf %5, %6 : vector<2x16xf32>
    %c0_6 = arith.constant 0 : index
    %c0_7 = arith.constant 0 : index
    %8 = vector.load %arg3[%c0_6, %c0_7] : memref<16x128xf32, #tpu.memory_space<vmem>>, vector<16x128xf32>
    %cst_8 = arith.constant dense<0.000000e+00> : vector<2x128xf32>
    %9 = tpu.matmul %7, %8, %cst_8 {dimension_numbers = #tpu.dot_dimension_numbers<[1], [0], [0], [1], [0, 0, 1, 1], [], []>} : vector<2x16xf32>, vector<16x128xf32>, vector<2x128xf32> -> vector<2x128xf32>
    %c0_9 = arith.constant 0 : index
    %c0_10 = arith.constant 0 : index
    %10 = vector.load %arg4[%c0_9, %c0_10] : memref<1x128xf32, #tpu.memory_space<vmem>>, vector<1x128xf32>
    %11 = vector.broadcast %10 : vector<1x128xf32> to vector<2x128xf32>
    %12 = arith.addf %9, %11 : vector<2x128xf32>
    %13 = math.tanh %12 : vector<2x128xf32>
    %cst_11 = arith.constant 0.176776692 : f32
    %14 = vector.broadcast %cst_11 : f32 to vector<2x128xf32>
    %15 = arith.mulf %13, %14 : vector<2x128xf32>
    %c0_12 = arith.constant 0 : index
    %c0_13 = arith.constant 0 : index
    %16 = vector.load %arg5[%c0_12, %c0_13] : memref<2x128xf32, #tpu.memory_space<vmem>>, vector<2x128xf32>
    tpu.vector_store %arg5[%c0_12, %c0_13], %15 {strides = array<i32>} : memref<2x128xf32, #tpu.memory_space<vmem>>, vector<2x128xf32>,
    return
  }
}

</mosaic_0001>

<llo_original>
// kernel: tpu_custom_call.1
$region0: #{tpu_custom_call.1}
  #allocation0 [shape = 'u32[]', space=smem, size = 0x4, offset = 0x4, fixed_abs, tag = 'smem constant byte address 0x4 - core index']
  #allocation1 [shape = 'u32[72,128]{1,0:T(1,128)}', space=vmem, size = 0x9000, scoped, tag = 'internal scratch']
  %s0 = inlined_call_operand.hbm [shape: f32[2,16], index: 0, kind: input, shape index: {}]
  %s1 = inlined_call_operand.hbm [shape: f32[16,16], index: 1, kind: input, shape index: {}]
  %s2 = inlined_call_operand.vmem [shape: f32[1,16], index: 2, kind: input, shape index: {}]
  %s3 = inlined_call_operand.hbm [shape: f32[16,128], index: 3, kind: input, shape index: {}]
  %s4 = inlined_call_operand.vmem [shape: f32[1,128], index: 4, kind: input, shape index: {}]
  %s5 = inlined_call_operand.hbm [shape: f32[2,128], index: 5, kind: output, shape index: {}]
  %s6 = sld [smem:[#allocation0]]
  $region42: #{tpu_custom_call.1} parent=0
    _
  %s8 = ssub.s32 1, %s6
  %s9 = scalar_select 0, %s8, %s6
  $region1: #{tpu_custom_call.1} parent=0
    #allocation2 [shape = 'u8[1024]{0}', space=vmem, size = 0x400, scoped, tag = 'input window, operand 0, single buffered']
    #allocation3 [shape = 's32[1]{0}', space=sflag, size = 0x4, scoped, tag = 'scoped memory for tpu_custom_call.1']
    #allocation4 [shape = 's32[1]{0}', space=sflag, size = 0x4, scoped, tag = 'scoped memory for tpu_custom_call.1']
    #allocation5 [shape = 'u8[8192]{0}', space=vmem, size = 0x2000, scoped, tag = 'input window, operand 1, single buffered']
    #allocation6 [shape = 's32[1]{0}', space=sflag, size = 0x4, scoped, tag = 'scoped memory for tpu_custom_call.1']
    #allocation7 [shape = 'u8[8192]{0}', space=vmem, size = 0x2000, scoped, tag = 'input window, operand 3, single buffered']
    #allocation8 [shape = 'u8[1024]{0}', space=vmem, size = 0x400, scoped, tag = 'output window, operand 0, single buffered']
    %10 = vsyncpa [#allocation3], 0
    %11 = vsyncpa [#allocation6], 0
    %12 = vsyncpa [#allocation4], 0
    // Predicated region
    $region2: #{tpu_custom_call.1} parent=1 // pred_check
      _
    $region3: #{tpu_custom_call.1} parent=1 // pred_check_branch
      %14 = sbr.rel (0) target = $region5
    $region4: #{tpu_custom_call.1} parent=1 // pred_region
      %16 = vsyncadd [#allocation3], 0
      %s18 = sshll.u32 %s0, 4
      %s19 = int_to_ptr.hbm [resolvable:$true] %s18
      %s20 = sshll.u32 [#allocation2], 4
      %s21 = int_to_ptr.vmem [resolvable:$true] %s20
      %23 = dma.hbm_to_vmem [thread:$0]  %s19, 32, %s21, [#allocation3]
    $region5: #{tpu_custom_call.1} parent=1 // pred_fallthru
      _
    // Predicated region
    $region6: #{tpu_custom_call.1} parent=1 // pred_check
      _
    $region7: #{tpu_custom_call.1} parent=1 // pred_check_branch
      %25 = sbr.rel (0) target = $region9
    $region8: #{tpu_custom_call.1} parent=1 // pred_region
      %27 = vsyncadd [#allocation6], 0
      %s28 = sshll.u32 %s1, 4
      %s29 = int_to_ptr.hbm [resolvable:$true] %s28
      %s30 = sshll.u32 [#allocation5], 4
      %s31 = int_to_ptr.vmem [resolvable:$true] %s30
      %36 = dma.hbm_to_vmem [thread:$0]  %s29, 256, %s31, [#allocation6], 128, 128, 8
    $region9: #{tpu_custom_call.1} parent=1 // pred_fallthru
      _
    // Predicated region
    $region10: #{tpu_custom_call.1} parent=1 // pred_check
      _
    $region11: #{tpu_custom_call.1} parent=1 // pred_check_branch
      %38 = sbr.rel (0) target = $region13
    $region12: #{tpu_custom_call.1} parent=1 // pred_region
      _
    $region13: #{tpu_custom_call.1} parent=1 // pred_fallthru
      _
    // Predicated region
    $region14: #{tpu_custom_call.1} parent=1 // pred_check
      _
    $region15: #{tpu_custom_call.1} parent=1 // pred_check_branch
      %40 = sbr.rel (0) target = $region17
    $region16: #{tpu_custom_call.1} parent=1 // pred_region
      %42 = vsyncadd [#allocation6], 0
      %s43 = sshll.u32 %s3, 4
      %s44 = int_to_ptr.hbm [resolvable:$true] %s43
      %s45 = sshll.u32 [#allocation7], 4
      %s46 = int_to_ptr.vmem [resolvable:$true] %s45
      %51 = dma.hbm_to_vmem [thread:$0]  %s44, 256, %s46, [#allocation6], 128, 128, 8
    $region17: #{tpu_custom_call.1} parent=1 // pred_fallthru
      _
    // Predicated region
    $region18: #{tpu_custom_call.1} parent=1 // pred_check
      _
    $region19: #{tpu_custom_call.1} parent=1 // pred_check_branch
      %53 = sbr.rel (0) target = $region21
    $region20: #{tpu_custom_call.1} parent=1 // pred_region
      _
    $region21: #{tpu_custom_call.1} parent=1 // pred_fallthru
      _
    // Predicated region
    $region22: #{tpu_custom_call.1} parent=1 // pred_check
      _
    $region23: #{tpu_custom_call.1} parent=1 // pred_check_branch
      %55 = sbr.rel (0) target = $region25
    $region24: #{tpu_custom_call.1} parent=1 // pred_region
      %57 = dma.done [#allocation3], 32
    $region25: #{tpu_custom_call.1} parent=1 // pred_fallthru
      _
    // Predicated region
    $region26: #{tpu_custom_call.1} parent=1 // pred_check
      _
    $region27: #{tpu_custom_call.1} parent=1 // pred_check_branch
      %59 = sbr.rel (0) target = $region29
    $region28: #{tpu_custom_call.1} parent=1 // pred_region
      %61 = dma.done [#allocation6], 256
    $region29: #{tpu_custom_call.1} parent=1 // pred_fallthru
      _
    // Predicated region
    $region30: #{tpu_custom_call.1} parent=1 // pred_check
      _
    $region31: #{tpu_custom_call.1} parent=1 // pred_check_branch
      %63 = sbr.rel (0) target = $region33
    $region32: #{tpu_custom_call.1} parent=1 // pred_region
      %65 = dma.done [#allocation6], 256
    $region33: #{tpu_custom_call.1} parent=1 // pred_fallthru
      _
    %v66 = vld [vmem:[#allocation2] sm:$0x3]
    %v67 = vld [vmem:[#allocation5] sm:$0xff]
    %v68 = vld [vmem:[#allocation5 + $0x8] sm:$0xff]
    %v69 = vld [vmem:[%s2] sm:$0x1]
    %v71 = vperm.slane %v69, 0
    %vm73 = vcmask 130048
    %v75 = vsel %vm73, %v66, 0
    %77 = vmatpush.msra.mxu0 0.0
    %78 = vmatpush.msra.mxu0 0.0
    %79 = vmatpush.msra.mxu0 0.0
    %80 = vmatpush.msra.mxu0 0.0
    %81 = vmatpush.msra.mxu0 0.0
    %82 = vmatpush.msra.mxu0 0.0
    %83 = vmatpush.msra.mxu0 0.0
    %84 = vmatpush.msra.mxu0 0.0
    %85 = vmatpush.msra.mxu0 0.0
    %86 = vmatpush.msra.mxu0 0.0
    %87 = vmatpush.msra.mxu0 0.0
    %88 = vmatpush.msra.mxu0 0.0
    %89 = vmatpush.msra.mxu0 0.0
    %90 = vmatpush.msra.mxu0 0.0
    %91 = vmatpush.msra.mxu0 %v68
    %92 = vmatpush.msra.mxu0 %v67
    %93 = vmatmul.f32.gmra.mxu0 %v75
    %v94 = vpop.f32.mrf.mxu0
    %v95 = vadd.f32 %v71, %v94
    %96 = vdwg.mxu0
    %v97 = vmax.f32 %v95, 0.0
    %v98 = vld [vmem:[#allocation7] sm:$0xff]
    %v99 = vld [vmem:[#allocation7 + $0x8] sm:$0xff]
    %v100 = vld [vmem:[%s4] sm:$0x1]
    %v102 = vperm.slane %v100, 0
    %v105 = vsel %vm73, %v97, 0
    %107 = vmatpush.msra.mxu0 0.0
    %108 = vmatpush.msra.mxu0 0.0
    %109 = vmatpush.msra.mxu0 0.0
    %110 = vmatpush.msra.mxu0 0.0
    %111 = vmatpush.msra.mxu0 0.0
    %112 = vmatpush.msra.mxu0 0.0
    %113 = vmatpush.msra.mxu0 0.0
    %114 = vmatpush.msra.mxu0 0.0
    %115 = vmatpush.msra.mxu0 0.0
    %116 = vmatpush.msra.mxu0 0.0
    %117 = vmatpush.msra.mxu0 0.0
    %118 = vmatpush.msra.mxu0 0.0
    %119 = vmatpush.msra.mxu0 0.0
    %120 = vmatpush.msra.mxu0 0.0
    %121 = vmatpush.msra.mxu0 %v99
    %122 = vmatpush.msra.mxu0 %v98
    %123 = vmatmul.f32.gmra.mxu0 %v105
    %v124 = vpop.f32.mrf.mxu0
    %v125 = vadd.f32 %v102, %v124
    %126 = vdwg.mxu0
    %v127 = vtanh.pop %v125
    %v128 = vmul.f32 %v127, 0.17677669
    %129 = vst [vmem:[#allocation8] sm:$0x3] %v128
    // Predicated region
    $region34: #{tpu_custom_call.1} parent=1 // pred_check
      _
    $region35: #{tpu_custom_call.1} parent=1 // pred_check_branch
      %131 = sbr.rel (0) target = $region37
    $region36: #{tpu_custom_call.1} parent=1 // pred_region
      %133 = vsyncadd [#allocation4], 0
      %s135 = sshll.u32 [#allocation8], 4
      %s136 = int_to_ptr.vmem [resolvable:$true] %s135
      %s137 = sshll.u32 %s5, 4
      %s138 = int_to_ptr.hbm [resolvable:$true] %s137
      %140 = dma.vmem_to_hbm [thread:$0]  %s136, 32, %s138, [#allocation4]
    $region37: #{tpu_custom_call.1} parent=1 // pred_fallthru
      _
    // Predicated region
    $region38: #{tpu_custom_call.1} parent=1 // pred_check
      _
    $region39: #{tpu_custom_call.1} parent=1 // pred_check_branch
      %142 = sbr.rel (0) target = $region41
    $region40: #{tpu_custom_call.1} parent=1 // pred_region
      %144 = dma.done [#allocation4], 32
    $region41: #{tpu_custom_call.1} parent=1 // pred_fallthru
      _
    %145 = vsyncpa [#allocation3], 1
    %146 = vsyncpa [#allocation6], 1
    %147 = vsyncpa [#allocation4], 1

</llo_original>
